<compile_context>
chip_gen: v6e
topology: v6e:2x2x1
jax: 0.10.0
libtpu: 0.0.40
codegen_flags: <defaults>
</compile_context>

<pallas_src>
import jax
import jax.numpy as jnp
from jax import lax
from jax.experimental import pallas as pl
from jax.experimental.pallas import tpu as pltpu

IN_FEATURES = 10
OUT_FEATURES = 2

PACK = 64                          # original rows merged per packed row
PACKED_IN = PACK * IN_FEATURES     # 640  = 5 * 128 lanes  (dense loads)
PACKED_OUT = PACK * OUT_FEATURES   # 128  = 1 * 128 lanes  (dense stores)

TILE_R = 1024                      # packed rows per grid step (= 65536 rows)
SMALL_B = 1024                     # below this, one gridless whole-array call


def _round_up(n, m):
    return ((n + m - 1) // m) * m


def _linear_small_kernel(x_ref, w_ref, b_ref, o_ref):
    # x: (B, 10) ; w: (2, 10) PyTorch layout ; b: (1, 2)
    acc = lax.dot_general(
        x_ref[...], w_ref[...],
        dimension_numbers=(((1,), (1,)), ((), ())),   # x @ w.T, no transpose
        preferred_element_type=jnp.float32,
    )                                                  # (B, 2)
    o_ref[...] = (acc + b_ref[...]).astype(o_ref.dtype)


def _linear_packed_kernel(x_ref, w_ref, b_ref, o_ref):
    # x: (tile_r, 640) ; w: (640, 128) block-diagonal ; b: (1, 128) tiled bias
    acc = jnp.dot(x_ref[...], w_ref[...],
                  preferred_element_type=jnp.float32)  # (tile_r, 128)
    o_ref[...] = (acc + b_ref[...]).astype(o_ref.dtype)


def linear_forward(x, weight, bias):
    """Equivalent of nn.Linear(10, 2).forward: y = x @ weight.T + bias.

    x: (B, 10); weight: (2, 10); bias: (2,). Returns (B, 2).
    """
    B = x.shape[0]

    if B <= SMALL_B:
        # Tiny batch: single gridless invocation, whole arrays in VMEM.
        return pl.pallas_call(
            _linear_small_kernel,
            out_shape=jax.ShapeDtypeStruct((B, OUT_FEATURES), x.dtype),
            in_specs=[
                pl.BlockSpec(memory_space=pltpu.MemorySpace.VMEM),
                pl.BlockSpec(memory_space=pltpu.MemorySpace.VMEM),
                pl.BlockSpec(memory_space=pltpu.MemorySpace.VMEM),
            ],
            out_specs=pl.BlockSpec(memory_space=pltpu.MemorySpace.VMEM),
        )(x, weight, bias.reshape(1, OUT_FEATURES))

    # ---- Large batch: lane-dense packed layout ----
    # Pad B only up to a multiple of PACK (needed for the row-merge reshape).
    Bp = _round_up(B, PACK)
    x_in = x if Bp == B else jnp.pad(x, ((0, Bp - B), (0, 0)))
    xp = x_in.reshape(Bp // PACK, PACKED_IN)          # row-major merge: free

    # Constant block-diagonal weight: 64 copies of W^T (10,2) on the diagonal.
    w_bd = jnp.kron(jnp.eye(PACK, dtype=weight.dtype), weight.T)  # (640, 128)
    b_tiled = jnp.tile(bias, PACK).reshape(1, PACKED_OUT)         # (1, 128)

    Rp = Bp // PACK
    tile_r = min(TILE_R, _round_up(Rp, 8))            # keep sublane-aligned
    grid = (pl.cdiv(Rp, tile_r),)                     # ragged last block OK

    out_p = pl.pallas_call(
        _linear_packed_kernel,
        out_shape=jax.ShapeDtypeStruct((Rp, PACKED_OUT), x.dtype),
        grid=grid,
        in_specs=[
            pl.BlockSpec((tile_r, PACKED_IN), lambda i: (i, 0)),
            pl.BlockSpec((PACKED_IN, PACKED_OUT), lambda i: (0, 0)),
            pl.BlockSpec((1, PACKED_OUT), lambda i: (0, 0)),
        ],
        out_specs=pl.BlockSpec((tile_r, PACKED_OUT), lambda i: (i, 0)),
        compiler_params=pltpu.CompilerParams(
            # Batch axis is embarrassingly parallel -> megacore sharding on v7x.
            dimension_semantics=("parallel",),
        ),
    )(xp, w_bd, b_tiled)

    out = out_p.reshape(Bp, OUT_FEATURES)             # row-major split: free
    return out if Bp == B else out[:B]


def init_params(key):
    # Deterministic init mirroring nn.Linear(10, 2) parameter shapes.
    kw, kb = jax.random.split(key)
    bound = 1.0 / jnp.sqrt(IN_FEATURES)
    weight = jax.random.uniform(
        kw, (OUT_FEATURES, IN_FEATURES), jnp.float32, -bound, bound)
    bias = jax.random.uniform(
        kb, (OUT_FEATURES,), jnp.float32, -bound, bound)
    return weight, bias


if __name__ == "__main__":
    key = jax.random.PRNGKey(0)
    k_x, k_p, k_xl = jax.random.split(key, 3)

    weight, bias = init_params(k_p)

    # Small batch -> gridless path (the tiny shape the module implies).
    batch = 8
    x = jax.random.normal(k_x, (batch, IN_FEATURES), jnp.float32)
    out = jax.block_until_ready(linear_forward(x, weight, bias))
    ref = x @ weight.T + bias
    assert out.shape == (batch, OUT_FEATURES)
    assert jnp.allclose(out, ref, atol=1e-4, rtol=1e-4)

    # Larger, non-multiple batch -> exercises the lane-dense packed/tiled path
    # (2 grid steps, ragged last block, pad-to-64 tail).
    big_batch = PACK * TILE_R + 100
    xl = jax.random.normal(k_xl, (big_batch, IN_FEATURES), jnp.float32)
    out_l = jax.block_until_ready(linear_forward(xl, weight, bias))
    ref_l = xl @ weight.T + bias
    assert out_l.shape == (big_batch, OUT_FEATURES)
    assert jnp.allclose(out_l, ref_l, atol=1e-4, rtol=1e-4)

    print("KERNEL_OK")
</pallas_src>

<mosaic_0001>
module attributes {stable_mosaic.version = 11 : i64} {
  func.func @_linear_small_kernel(%arg0: memref<8x10xf32, #tpu.memory_space<vmem>>, %arg1: memref<2x10xf32, #tpu.memory_space<vmem>>, %arg2: memref<1x2xf32, #tpu.memory_space<vmem>>, %arg3: memref<8x2xf32, #tpu.memory_space<vmem>>) attributes {dimension_semantics = [], scalar_prefetch = 0 : i64, scratch_operands = 0 : i64, tpu.core_type = #tpu.core_type<tc>} {
    %c0 = arith.constant 0 : index
    %c0_0 = arith.constant 0 : index
    %0 = vector.load %arg0[%c0, %c0_0] : memref<8x10xf32, #tpu.memory_space<vmem>>, vector<8x10xf32>
    %c0_1 = arith.constant 0 : index
    %c0_2 = arith.constant 0 : index
    %1 = vector.load %arg1[%c0_1, %c0_2] : memref<2x10xf32, #tpu.memory_space<vmem>>, vector<2x10xf32>
    %cst = arith.constant dense<0.000000e+00> : vector<8x2xf32>
    %2 = tpu.matmul %0, %1, %cst {dimension_numbers = #tpu.dot_dimension_numbers<[1], [1], [0], [0], [0, 0, 1, 0], [], []>} : vector<8x10xf32>, vector<2x10xf32>, vector<8x2xf32> -> vector<8x2xf32>
    %c0_3 = arith.constant 0 : index
    %c0_4 = arith.constant 0 : index
    %3 = vector.load %arg2[%c0_3, %c0_4] : memref<1x2xf32, #tpu.memory_space<vmem>>, vector<1x2xf32>
    %4 = vector.broadcast %3 : vector<1x2xf32> to vector<8x2xf32>
    %5 = arith.addf %2, %4 : vector<8x2xf32>
    %c0_5 = arith.constant 0 : index
    %c0_6 = arith.constant 0 : index
    %6 = vector.load %arg3[%c0_5, %c0_6] : memref<8x2xf32, #tpu.memory_space<vmem>>, vector<8x2xf32>
    tpu.vector_store %arg3[%c0_5, %c0_6], %5 {strides = array<i32>} : memref<8x2xf32, #tpu.memory_space<vmem>>, vector<8x2xf32>,
    return
  }
}

</mosaic_0001>

<llo_original>
// kernel: tpu_custom_call.1
$region0: #{tpu_custom_call.1}
  #allocation0 [shape = 'u32[]', space=smem, size = 0x4, offset = 0x4, fixed_abs, tag = 'smem constant byte address 0x4 - core index']
  #allocation1 [shape = 'u32[144,128]{1,0:T(1,128)}', space=vmem, size = 0x12000, scoped, tag = 'internal scratch']
  %s0 = inlined_call_operand.hbm [shape: f32[8,10], index: 0, kind: input, shape index: {}]
  %s1 = inlined_call_operand.hbm [shape: f32[2,10], index: 1, kind: input, shape index: {}]
  %s2 = inlined_call_operand.vmem [shape: f32[1,2], index: 2, kind: input, shape index: {}]
  %s3 = inlined_call_operand.vmem [shape: f32[8,2], index: 3, kind: output, shape index: {}]
  %s4 = sld [smem:[#allocation0]]
  $region30: #{tpu_custom_call.1} parent=0
    _
  %s6 = ssub.s32 1, %s4
  %s7 = scalar_select 0, %s6, %s4
  $region1: #{tpu_custom_call.1} parent=0
    #allocation2 [shape = 'u8[4096]{0}', space=vmem, size = 0x1000, scoped, tag = 'input window, operand 0, single buffered']
    #allocation3 [shape = 's32[1]{0}', space=sflag, size = 0x4, scoped, tag = 'scoped memory for tpu_custom_call.1']
    #allocation4 [shape = 'u8[1024]{0}', space=vmem, size = 0x400, scoped, tag = 'input window, operand 1, single buffered']
    #allocation5 [shape = 's32[1]{0}', space=sflag, size = 0x4, scoped, tag = 'scoped memory for tpu_custom_call.1']
    %8 = vsyncpa [#allocation3], 0
    %9 = vsyncpa [#allocation5], 0
    // Predicated region
    $region2: #{tpu_custom_call.1} parent=1 // pred_check
      _
    $region3: #{tpu_custom_call.1} parent=1 // pred_check_branch
      %11 = sbr.rel (0) target = $region5
    $region4: #{tpu_custom_call.1} parent=1 // pred_region
      %s13 = ssub.s32 128, 128
      %14 = vsyncadd [#allocation3], %s13
      %s16 = sshll.u32 [#allocation2], 4
      %s17 = int_to_ptr.vmem [resolvable:$true] %s16
      %19 = dma.hbm_to_vmem [thread:$0]  %s0, 128, %s17, [#allocation3]
    $region5: #{tpu_custom_call.1} parent=1 // pred_fallthru
      _
    // Predicated region
    $region6: #{tpu_custom_call.1} parent=1 // pred_check
      _
    $region7: #{tpu_custom_call.1} parent=1 // pred_check_branch
      %21 = sbr.rel (0) target = $region9
    $region8: #{tpu_custom_call.1} parent=1 // pred_region
      %s23 = ssub.s32 32, 32
      %24 = vsyncadd [#allocation5], %s23
      %s26 = sshll.u32 [#allocation4], 4
      %s27 = int_to_ptr.vmem [resolvable:$true] %s26
      %29 = dma.hbm_to_vmem [thread:$0]  %s1, 32, %s27, [#allocation5]
    $region9: #{tpu_custom_call.1} parent=1 // pred_fallthru
      _
    // Predicated region
    $region10: #{tpu_custom_call.1} parent=1 // pred_check
      _
    $region11: #{tpu_custom_call.1} parent=1 // pred_check_branch
      %31 = sbr.rel (0) target = $region13
    $region12: #{tpu_custom_call.1} parent=1 // pred_region
      _
    $region13: #{tpu_custom_call.1} parent=1 // pred_fallthru
      _
    // Predicated region
    $region14: #{tpu_custom_call.1} parent=1 // pred_check
      _
    $region15: #{tpu_custom_call.1} parent=1 // pred_check_branch
      %33 = sbr.rel (0) target = $region17
    $region16: #{tpu_custom_call.1} parent=1 // pred_region
      %34 = dma.done [#allocation3], 128
    $region17: #{tpu_custom_call.1} parent=1 // pred_fallthru
      _
    // Predicated region
    $region18: #{tpu_custom_call.1} parent=1 // pred_check
      _
    $region19: #{tpu_custom_call.1} parent=1 // pred_check_branch
      %36 = sbr.rel (0) target = $region21
    $region20: #{tpu_custom_call.1} parent=1 // pred_region
      %37 = dma.done [#allocation5], 32
    $region21: #{tpu_custom_call.1} parent=1 // pred_fallthru
      _
    %v38 = vld [vmem:[#allocation2] sm:$0xff]
    %v39 = vld [vmem:[#allocation4] sm:$0x3]
    %v40 = vld [vmem:[%s2] sm:$0x1]
    %v42 = vlaneseq
    %v43 = vshrl.u32 %v42, 7
    %v44 = vsub.s32 0, %v43
    %v45 = vrot.slane %v40, %v44
    %vm47 = vcmask 80896
    %v49 = vsel %vm47, %v38, 0
    %v52 = vsel %vm47, %v39, 0
    %54 = vmatprep.subr.mxu0 0.0
    %55 = vmatpush1.xpose.msra.mxu0 0.0
    %56 = vmatprep.subr.mxu0 0.0
    %57 = vmatpush1.xpose.msra.mxu0 0.0
    %58 = vmatprep.subr.mxu0 0.0
    %59 = vmatpush1.xpose.msra.mxu0 0.0
    %60 = vmatprep.subr.mxu0 0.0
    %61 = vmatpush1.xpose.msra.mxu0 0.0
    %62 = vmatprep.subr.mxu0 0.0
    %63 = vmatpush1.xpose.msra.mxu0 0.0
    %64 = vmatprep.subr.mxu0 0.0
    %65 = vmatpush1.xpose.msra.mxu0 0.0
    %66 = vmatprep.subr.mxu0 0.0
    %67 = vmatpush1.xpose.msra.mxu0 0.0
    %68 = vmatprep.subr.mxu0 0.0
    %69 = vmatpush1.xpose.msra.mxu0 0.0
    %70 = vmatprep.subr.mxu0 0.0
    %71 = vmatpush1.xpose.msra.mxu0 0.0
    %72 = vmatprep.subr.mxu0 0.0
    %73 = vmatpush1.xpose.msra.mxu0 0.0
    %74 = vmatprep.subr.mxu0 0.0
    %75 = vmatpush1.xpose.msra.mxu0 0.0
    %76 = vmatprep.subr.mxu0 0.0
    %77 = vmatpush1.xpose.msra.mxu0 0.0
    %78 = vmatprep.subr.mxu0 0.0
    %79 = vmatpush1.xpose.msra.mxu0 0.0
    %80 = vmatprep.subr.mxu0 0.0
    %81 = vmatpush1.xpose.msra.mxu0 0.0
    %82 = vmatprep.subr.mxu0 0.0
    %83 = vmatpush1.xpose.msra.mxu0 0.0
    %84 = vmatprep.subr.mxu0 0.0
    %85 = vmatpush1.xpose.msra.mxu0 %v52
    %86 = vmatprep.subr.mxu0 0.0
    %87 = vmatpush2.xpose.msra.mxu0 0.0
    %88 = vmatprep.subr.mxu0 0.0
    %89 = vmatpush2.xpose.msra.mxu0 0.0
    %90 = vmatprep.subr.mxu0 0.0
    %91 = vmatpush2.xpose.msra.mxu0 0.0
    %92 = vmatprep.subr.mxu0 0.0
    %93 = vmatpush2.xpose.msra.mxu0 0.0
    %94 = vmatprep.subr.mxu0 0.0
    %95 = vmatpush2.xpose.msra.mxu0 0.0
    %96 = vmatprep.subr.mxu0 0.0
    %97 = vmatpush2.xpose.msra.mxu0 0.0
    %98 = vmatprep.subr.mxu0 0.0
    %99 = vmatpush2.xpose.msra.mxu0 0.0
    %100 = vmatprep.subr.mxu0 0.0
    %101 = vmatpush2.xpose.msra.mxu0 0.0
    %102 = vmatprep.subr.mxu0 0.0
    %103 = vmatpush2.xpose.msra.mxu0 0.0
    %104 = vmatprep.subr.mxu0 0.0
    %105 = vmatpush2.xpose.msra.mxu0 0.0
    %106 = vmatprep.subr.mxu0 0.0
    %107 = vmatpush2.xpose.msra.mxu0 0.0
    %108 = vmatprep.subr.mxu0 0.0
    %109 = vmatpush2.xpose.msra.mxu0 0.0
    %110 = vmatprep.subr.mxu0 0.0
    %111 = vmatpush2.xpose.msra.mxu0 0.0
    %112 = vmatprep.subr.mxu0 0.0
    %113 = vmatpush2.xpose.msra.mxu0 0.0
    %114 = vmatprep.subr.mxu0 0.0
    %115 = vmatpush2.xpose.msra.mxu0 0.0
    %116 = vmatprep.subr.mxu0 0.0
    %117 = vmatpush2.xpose.msra.mxu0 0.0
    %118 = vmatprep.mubr.f32.mxu0 0.0
    %119 = vmatmul.mubr.f32.gmra.mxu0 %v49
    %v120 = vpop.f32.mrf.mxu0
    %v121 = vadd.f32 %v45, %v120
    %v122 = vpop.f32.mrf.mxu0
    %123 = vdwg.mxu0
    %vm124 = vcmask 15360
    %125 = vst.msk [vmem:[%s3] sm:$0xff] %vm124, %v121
    // Predicated region
    $region22: #{tpu_custom_call.1} parent=1 // pred_check
      _
    $region23: #{tpu_custom_call.1} parent=1 // pred_check_branch
      %127 = sbr.rel (0) target = $region25
    $region24: #{tpu_custom_call.1} parent=1 // pred_region
      _
    $region25: #{tpu_custom_call.1} parent=1 // pred_fallthru
      _
    // Predicated region
    $region26: #{tpu_custom_call.1} parent=1 // pred_check
      _
    $region27: #{tpu_custom_call.1} parent=1 // pred_check_branch
      %129 = sbr.rel (0) target = $region29
    $region28: #{tpu_custom_call.1} parent=1 // pred_region
      _
    $region29: #{tpu_custom_call.1} parent=1 // pred_fallthru
      _
    %130 = vsyncpa [#allocation3], 1
    %131 = vsyncpa [#allocation5], 1

</llo_original>
